<compile_context>
chip_gen: v5e
topology: v5e:2x2
jax: 0.10.0
libtpu: 0.0.40
codegen_flags: <defaults>
</compile_context>

<pallas_src>
import functools

import jax
import jax.numpy as jnp
from jax.experimental import pallas as pl
from jax.experimental.pallas import tpu as pltpu

LANE = 128
SUBLANE = 8


def _round_up(n, m):
    return ((n + m - 1) // m) * m


def _choose_batch_tile(B, tb_max):
    """Pick a batch tile that minimises padding and keeps >=2 grid steps
    (for the v7x megacore) once B is large enough to amortise the ~0.35us
    per-grid-step overhead."""
    n_tiles = pl.cdiv(B, tb_max)
    if B >= 128 and n_tiles < 2:
        n_tiles = 2
    return _round_up(pl.cdiv(B, n_tiles), SUBLANE)


def mlp_kernel(x_ref, w1_ref, b1_ref, w2_ref, b2_ref, w3_ref, b3_ref, o_ref):
    # fc1 + ReLU   (dropout1 is identity at inference)
    x = x_ref[...].astype(w1_ref.dtype)          # cast to bf16 in-kernel (VMEM only)
    h1 = jnp.dot(x, w1_ref[...], preferred_element_type=jnp.float32)
    h1 = jnp.maximum(h1 + b1_ref[...], 0.0)
    # fc2 + ReLU   (dropout2 is identity at inference)
    h2 = jnp.dot(h1.astype(w2_ref.dtype), w2_ref[...],
                 preferred_element_type=jnp.float32)
    h2 = jnp.maximum(h2 + b2_ref[...], 0.0)
    # fc3 (logits, no activation) -- unpadded OUT-wide store
    out = jnp.dot(h2.astype(w3_ref.dtype), w3_ref[...],
                  preferred_element_type=jnp.float32) + b3_ref[...]
    o_ref[...] = out.astype(o_ref.dtype)


def prepare_params(w1, b1, w2, b2, w3, b3):
    """One-time (init-time) parameter prep: bf16 cast + H2 zero-pad to 128.

    Hoisted out of the per-call path so each forward does not re-run the
    pad/cast XLA ops."""
    F, H1 = w1.shape
    H2 = w2.shape[1]
    OUT = w3.shape[1]
    H2_pad = _round_up(H2, LANE)

    w1_p = w1.astype(jnp.bfloat16)                                   # (F, H1)
    b1_p = b1.reshape(1, H1).astype(jnp.float32)
    w2_p = jnp.pad(w2, ((0, 0), (0, H2_pad - H2))).astype(jnp.bfloat16)
    b2_p = jnp.pad(b2.reshape(1, H2),
                   ((0, 0), (0, H2_pad - H2))).astype(jnp.float32)
    w3_p = jnp.pad(w3, ((0, H2_pad - H2), (0, 0))).astype(jnp.bfloat16)
    b3_p = b3.reshape(1, OUT).astype(jnp.float32)
    return (w1_p, b1_p, w2_p, b2_p, w3_p, b3_p)


@functools.partial(jax.jit, static_argnames=("tb_max",))
def feedforward_nn(x, params, *, tb_max=2048):
    """Fused 3-layer MLP forward. Returns f32 logits of shape [B, OUT]."""
    w1, b1, w2, b2, w3, b3 = params
    B, F = x.shape
    H1 = w1.shape[1]
    H2p = w2.shape[1]          # already padded to a multiple of 128
    OUT = w3.shape[1]

    TB = _choose_batch_tile(B, tb_max)
    B_pad = _round_up(B, TB)
    x_p = x if B_pad == B else jnp.pad(x, ((0, B_pad - B), (0, 0)))

    grid = (B_pad // TB,)

    flops = 2 * B_pad * (F * H1 + H1 * H2p + H2p * OUT)
    bytes_accessed = (
        B_pad * F * 4                                  # x (f32, unpadded)
        + w1.size * 2 + w2.size * 2 + w3.size * 2      # bf16 weights
        + b1.size * 4 + b2.size * 4 + b3.size * 4      # f32 biases
        + B_pad * OUT * 4                              # f32 logits (unpadded)
    )

    out = pl.pallas_call(
        mlp_kernel,
        out_shape=jax.ShapeDtypeStruct((B_pad, OUT), jnp.float32),
        grid=grid,
        in_specs=[
            # batch-tiled activation (f32, raw; last dim == full array dim)
            pl.BlockSpec((TB, F), lambda i: (i, 0)),
            # weights / biases: constant index_map -> resident in VMEM
            pl.BlockSpec((F, H1), lambda i: (0, 0)),
            pl.BlockSpec((1, H1), lambda i: (0, 0)),
            pl.BlockSpec((H1, H2p), lambda i: (0, 0)),
            pl.BlockSpec((1, H2p), lambda i: (0, 0)),
            pl.BlockSpec((H2p, OUT), lambda i: (0, 0)),
            pl.BlockSpec((1, OUT), lambda i: (0, 0)),
        ],
        # unpadded output block: last dim == full array dim (OUT), legal.
        out_specs=pl.BlockSpec((TB, OUT), lambda i: (i, 0)),
        compiler_params=pltpu.CompilerParams(
            dimension_semantics=("parallel",),
        ),
        cost_estimate=pl.CostEstimate(
            flops=flops, transcendentals=0, bytes_accessed=bytes_accessed
        ),
    )(x_p, w1, b1, w2, b2, w3, b3)

    return out if B_pad == B else out[:B]


def reference(x, w1, b1, w2, b2, w3, b3):
    h1 = jnp.maximum(x @ w1 + b1, 0.0)
    h2 = jnp.maximum(h1 @ w2 + b2, 0.0)
    return h2 @ w3 + b3


if __name__ == "__main__":
    # Small shapes consistent with the module (breast-cancer feature dim).
    B, F, H1, H2, OUT = 8, 30, 128, 64, 2

    key = jax.random.PRNGKey(0)
    kx, k1, k2, k3, k4, k5, k6 = jax.random.split(key, 7)

    x = jax.random.normal(kx, (B, F), dtype=jnp.float32)

    # Deterministic synthetic parameters (not a checkpoint load).
    w1 = jax.random.normal(k1, (F, H1), dtype=jnp.float32) * 0.1
    b1 = jax.random.normal(k2, (1, H1), dtype=jnp.float32) * 0.1
    w2 = jax.random.normal(k3, (H1, H2), dtype=jnp.float32) * 0.1
    b2 = jax.random.normal(k4, (1, H2), dtype=jnp.float32) * 0.1
    w3 = jax.random.normal(k5, (H2, OUT), dtype=jnp.float32) * 0.1
    b3 = jax.random.normal(k6, (1, OUT), dtype=jnp.float32) * 0.1

    # One-time parameter prep (hoisted out of the forward call).
    params = prepare_params(w1, b1, w2, b2, w3, b3)

    out = feedforward_nn(x, params)
    out = jax.block_until_ready(out)

    ref = reference(x, w1, b1, w2, b2, w3, b3)
    assert out.shape == (B, OUT)
    # bf16 matmul inputs with f32 accumulation -> slightly looser tolerance.
    assert jnp.allclose(out, ref, atol=5e-2, rtol=5e-2), (
        f"max abs err {jnp.max(jnp.abs(out - ref))}"
    )

    print("KERNEL_OK")
</pallas_src>

<mosaic_0001>
module attributes {stable_mosaic.version = 11 : i64} {
  func.func @mlp_kernel(%arg0: i32, %arg1: memref<8x30xf32, #tpu.memory_space<vmem>>, %arg2: memref<30x128xbf16, #tpu.memory_space<vmem>>, %arg3: memref<1x128xf32, #tpu.memory_space<vmem>>, %arg4: memref<128x128xbf16, #tpu.memory_space<vmem>>, %arg5: memref<1x128xf32, #tpu.memory_space<vmem>>, %arg6: memref<128x2xbf16, #tpu.memory_space<vmem>>, %arg7: memref<1x2xf32, #tpu.memory_space<vmem>>, %arg8: memref<8x2xf32, #tpu.memory_space<vmem>>) attributes {dimension_semantics = [#tpu.dimension_semantics<parallel>], iteration_bounds = array<i64: 1>, scalar_prefetch = 0 : i64, scratch_operands = 0 : i64, tpu.core_type = #tpu.core_type<tc>, window_params = [{transform_indices = @transform_0, window_bounds = array<i64: 8, 30>}, {pipeline_mode = #tpu.pipeline_mode<synchronous>, transform_indices = @transform_1, window_bounds = array<i64: 30, 128>}, {pipeline_mode = #tpu.pipeline_mode<synchronous>, transform_indices = @transform_2, window_bounds = array<i64: 1, 128>}, {pipeline_mode = #tpu.pipeline_mode<synchronous>, transform_indices = @transform_3, window_bounds = array<i64: 128, 128>}, {pipeline_mode = #tpu.pipeline_mode<synchronous>, transform_indices = @transform_4, window_bounds = array<i64: 1, 128>}, {pipeline_mode = #tpu.pipeline_mode<synchronous>, transform_indices = @transform_5, window_bounds = array<i64: 128, 2>}, {pipeline_mode = #tpu.pipeline_mode<synchronous>, transform_indices = @transform_6, window_bounds = array<i64: 1, 2>}, {transform_indices = @transform_7, window_bounds = array<i64: 8, 2>}]} {
    %c0 = arith.constant 0 : index
    %c0_0 = arith.constant 0 : index
    %0 = vector.load %arg1[%c0, %c0_0] : memref<8x30xf32, #tpu.memory_space<vmem>>, vector<8x30xf32>
    %1 = arith.truncf %0 : vector<8x30xf32> to vector<8x30xbf16>
    %c0_1 = arith.constant 0 : index
    %c0_2 = arith.constant 0 : index
    %2 = vector.load %arg2[%c0_1, %c0_2] : memref<30x128xbf16, #tpu.memory_space<vmem>>, vector<30x128xbf16>
    %cst = arith.constant dense<0.000000e+00> : vector<8x128xf32>
    %3 = tpu.matmul %1, %2, %cst {dimension_numbers = #tpu.dot_dimension_numbers<[1], [0], [0], [1], [0, 0, 1, 1], [], []>} : vector<8x30xbf16>, vector<30x128xbf16>, vector<8x128xf32> -> vector<8x128xf32>
    %c0_3 = arith.constant 0 : index
    %c0_4 = arith.constant 0 : index
    %4 = vector.load %arg3[%c0_3, %c0_4] : memref<1x128xf32, #tpu.memory_space<vmem>>, vector<1x128xf32>
    %5 = vector.broadcast %4 : vector<1x128xf32> to vector<8x128xf32>
    %6 = arith.addf %3, %5 : vector<8x128xf32>
    %cst_5 = arith.constant 0.000000e+00 : f32
    %7 = vector.broadcast %cst_5 : f32 to vector<8x128xf32>
    %8 = arith.maximumf %6, %7 : vector<8x128xf32>
    %9 = arith.truncf %8 : vector<8x128xf32> to vector<8x128xbf16>
    %c0_6 = arith.constant 0 : index
    %c0_7 = arith.constant 0 : index
    %10 = vector.load %arg4[%c0_6, %c0_7] : memref<128x128xbf16, #tpu.memory_space<vmem>>, vector<128x128xbf16>
    %cst_8 = arith.constant dense<0.000000e+00> : vector<8x128xf32>
    %11 = tpu.matmul %9, %10, %cst_8 {dimension_numbers = #tpu.dot_dimension_numbers<[1], [0], [0], [1], [0, 0, 1, 1], [], []>} : vector<8x128xbf16>, vector<128x128xbf16>, vector<8x128xf32> -> vector<8x128xf32>
    %c0_9 = arith.constant 0 : index
    %c0_10 = arith.constant 0 : index
    %12 = vector.load %arg5[%c0_9, %c0_10] : memref<1x128xf32, #tpu.memory_space<vmem>>, vector<1x128xf32>
    %13 = vector.broadcast %12 : vector<1x128xf32> to vector<8x128xf32>
    %14 = arith.addf %11, %13 : vector<8x128xf32>
    %cst_11 = arith.constant 0.000000e+00 : f32
    %15 = vector.broadcast %cst_11 : f32 to vector<8x128xf32>
    %16 = arith.maximumf %14, %15 : vector<8x128xf32>
    %17 = arith.truncf %16 : vector<8x128xf32> to vector<8x128xbf16>
    %c0_12 = arith.constant 0 : index
    %c0_13 = arith.constant 0 : index
    %18 = vector.load %arg6[%c0_12, %c0_13] : memref<128x2xbf16, #tpu.memory_space<vmem>>, vector<128x2xbf16>
    %cst_14 = arith.constant dense<0.000000e+00> : vector<8x2xf32>
    %19 = tpu.matmul %17, %18, %cst_14 {dimension_numbers = #tpu.dot_dimension_numbers<[1], [0], [0], [1], [0, 0, 1, 1], [], []>} : vector<8x128xbf16>, vector<128x2xbf16>, vector<8x2xf32> -> vector<8x2xf32>
    %c0_15 = arith.constant 0 : index
    %c0_16 = arith.constant 0 : index
    %20 = vector.load %arg7[%c0_15, %c0_16] : memref<1x2xf32, #tpu.memory_space<vmem>>, vector<1x2xf32>
    %21 = vector.broadcast %20 : vector<1x2xf32> to vector<8x2xf32>
    %22 = arith.addf %19, %21 : vector<8x2xf32>
    %c0_17 = arith.constant 0 : index
    %c0_18 = arith.constant 0 : index
    %23 = vector.load %arg8[%c0_17, %c0_18] : memref<8x2xf32, #tpu.memory_space<vmem>>, vector<8x2xf32>
    tpu.vector_store %arg8[%c0_17, %c0_18], %22 {strides = array<i32>} : memref<8x2xf32, #tpu.memory_space<vmem>>, vector<8x2xf32>,
    return
  }
  func.func @transform_0(%arg0: i32) -> (i32, i32) {
    %c0_i32 = arith.constant 0 : i32
    %c0_i32_0 = arith.constant 0 : i32
    return %arg0, %c0_i32 : i32, i32
  }
  func.func @transform_1(%arg0: i32) -> (i32, i32) {
    %c0_i32 = arith.constant 0 : i32
    %c0_i32_0 = arith.constant 0 : i32
    %c0_i32_1 = arith.constant 0 : i32
    return %c0_i32, %c0_i32_0 : i32, i32
  }
  func.func @transform_2(%arg0: i32) -> (i32, i32) {
    %c0_i32 = arith.constant 0 : i32
    %c0_i32_0 = arith.constant 0 : i32
    %c0_i32_1 = arith.constant 0 : i32
    return %c0_i32, %c0_i32_0 : i32, i32
  }
  func.func @transform_3(%arg0: i32) -> (i32, i32) {
    %c0_i32 = arith.constant 0 : i32
    %c0_i32_0 = arith.constant 0 : i32
    %c0_i32_1 = arith.constant 0 : i32
    return %c0_i32, %c0_i32_0 : i32, i32
  }
  func.func @transform_4(%arg0: i32) -> (i32, i32) {
    %c0_i32 = arith.constant 0 : i32
    %c0_i32_0 = arith.constant 0 : i32
    %c0_i32_1 = arith.constant 0 : i32
    return %c0_i32, %c0_i32_0 : i32, i32
  }
  func.func @transform_5(%arg0: i32) -> (i32, i32) {
    %c0_i32 = arith.constant 0 : i32
    %c0_i32_0 = arith.constant 0 : i32
    %c0_i32_1 = arith.constant 0 : i32
    return %c0_i32, %c0_i32_0 : i32, i32
  }
  func.func @transform_6(%arg0: i32) -> (i32, i32) {
    %c0_i32 = arith.constant 0 : i32
    %c0_i32_0 = arith.constant 0 : i32
    %c0_i32_1 = arith.constant 0 : i32
    return %c0_i32, %c0_i32_0 : i32, i32
  }
  func.func @transform_7(%arg0: i32) -> (i32, i32) {
    %c0_i32 = arith.constant 0 : i32
    %c0_i32_0 = arith.constant 0 : i32
    return %arg0, %c0_i32 : i32, i32
  }
}

</mosaic_0001>

<llo_original>
// kernel: feedforward_nn.1
$region0: #{feedforward_nn.1}
  #allocation0 [shape = 'u32[]', space=smem, size = 0x4, offset = 0x4, fixed_abs, tag = 'smem constant byte address 0x4 - core index']
  #allocation1 [shape = 'u32[72,128]{1,0:T(1,128)}', space=vmem, size = 0x9000, scoped, tag = 'internal scratch']
  %s0 = inlined_call_operand.hbm [shape: f32[8,30], index: 0, kind: input, shape index: {}]
  %s1 = inlined_call_operand.hbm [shape: bf16[30,128], index: 1, kind: input, shape index: {}]
  %s2 = inlined_call_operand.vmem [shape: f32[1,128], index: 2, kind: input, shape index: {}]
  %s3 = inlined_call_operand.vmem [shape: bf16[128,128], index: 3, kind: input, shape index: {}]
  %s4 = inlined_call_operand.vmem [shape: f32[1,128], index: 4, kind: input, shape index: {}]
  %s5 = inlined_call_operand.vmem [shape: bf16[128,2], index: 5, kind: input, shape index: {}]
  %s6 = inlined_call_operand.vmem [shape: f32[1,2], index: 6, kind: input, shape index: {}]
  %s7 = inlined_call_operand.vmem [shape: f32[8,2], index: 7, kind: output, shape index: {}]
  %s8 = sld [smem:[#allocation0]]
  $region46: #{feedforward_nn.1} parent=0
    _
  %s10 = ssub.s32 1, %s8
  %s11 = scalar_select 0, %s10, %s8
  $region1: #{feedforward_nn.1} parent=0
    #allocation2 [shape = 'u8[4096]{0}', space=vmem, size = 0x1000, scoped, tag = 'input window, operand 0, single buffered']
    #allocation3 [shape = 's32[1]{0}', space=sflag, size = 0x4, scoped, tag = 'scoped memory for feedforward_nn.1']
    #allocation4 [shape = 'u8[8192]{0}', space=vmem, size = 0x2000, scoped, tag = 'input window, operand 1, single buffered']
    #allocation5 [shape = 's32[1]{0}', space=sflag, size = 0x4, scoped, tag = 'scoped memory for feedforward_nn.1']
    %12 = vsyncpa [#allocation3], 0
    %13 = vsyncpa [#allocation5], 0
    // Predicated region
    $region2: #{feedforward_nn.1} parent=1 // pred_check
      _
    $region3: #{feedforward_nn.1} parent=1 // pred_check_branch
      %15 = sbr.rel (0) target = $region5
    $region4: #{feedforward_nn.1} parent=1 // pred_region
      %17 = vsyncadd [#allocation3], 0
      %s19 = sshll.u32 %s0, 4
      %s20 = int_to_ptr.hbm [resolvable:$true] %s19
      %s21 = sshll.u32 [#allocation2], 4
      %s22 = int_to_ptr.vmem [resolvable:$true] %s21
      %24 = dma.hbm_to_vmem [thread:$0]  %s20, 128, %s22, [#allocation3]
    $region5: #{feedforward_nn.1} parent=1 // pred_fallthru
      _
    // Predicated region
    $region6: #{feedforward_nn.1} parent=1 // pred_check
      _
    $region7: #{feedforward_nn.1} parent=1 // pred_check_branch
      %26 = sbr.rel (0) target = $region9
    $region8: #{feedforward_nn.1} parent=1 // pred_region
      %28 = vsyncadd [#allocation5], 0
      %s29 = sshll.u32 %s1, 4
      %s30 = int_to_ptr.hbm [resolvable:$true] %s29
      %s31 = sshll.u32 [#allocation4], 4
      %s32 = int_to_ptr.vmem [resolvable:$true] %s31
      %37 = dma.hbm_to_vmem [thread:$0]  %s30, 256, %s32, [#allocation5], 64, 64, 4
    $region9: #{feedforward_nn.1} parent=1 // pred_fallthru
      _
    // Predicated region
    $region10: #{feedforward_nn.1} parent=1 // pred_check
      _
    $region11: #{feedforward_nn.1} parent=1 // pred_check_branch
      %39 = sbr.rel (0) target = $region13
    $region12: #{feedforward_nn.1} parent=1 // pred_region
      _
    $region13: #{feedforward_nn.1} parent=1 // pred_fallthru
      _
    // Predicated region
    $region14: #{feedforward_nn.1} parent=1 // pred_check
      _
    $region15: #{feedforward_nn.1} parent=1 // pred_check_branch
      %41 = sbr.rel (0) target = $region17
    $region16: #{feedforward_nn.1} parent=1 // pred_region
      _
    $region17: #{feedforward_nn.1} parent=1 // pred_fallthru
      _
    // Predicated region
    $region18: #{feedforward_nn.1} parent=1 // pred_check
      _
    $region19: #{feedforward_nn.1} parent=1 // pred_check_branch
      %43 = sbr.rel (0) target = $region21
    $region20: #{feedforward_nn.1} parent=1 // pred_region
      _
    $region21: #{feedforward_nn.1} parent=1 // pred_fallthru
      _
    // Predicated region
    $region22: #{feedforward_nn.1} parent=1 // pred_check
      _
    $region23: #{feedforward_nn.1} parent=1 // pred_check_branch
      %45 = sbr.rel (0) target = $region25
    $region24: #{feedforward_nn.1} parent=1 // pred_region
      _
    $region25: #{feedforward_nn.1} parent=1 // pred_fallthru
      _
    // Predicated region
    $region26: #{feedforward_nn.1} parent=1 // pred_check
      _
    $region27: #{feedforward_nn.1} parent=1 // pred_check_branch
      %47 = sbr.rel (0) target = $region29
    $region28: #{feedforward_nn.1} parent=1 // pred_region
      _
    $region29: #{feedforward_nn.1} parent=1 // pred_fallthru
      _
    // Predicated region
    $region30: #{feedforward_nn.1} parent=1 // pred_check
      _
    $region31: #{feedforward_nn.1} parent=1 // pred_check_branch
      %49 = sbr.rel (0) target = $region33
    $region32: #{feedforward_nn.1} parent=1 // pred_region
      %51 = dma.done [#allocation3], 128
    $region33: #{feedforward_nn.1} parent=1 // pred_fallthru
      _
    // Predicated region
    $region34: #{feedforward_nn.1} parent=1 // pred_check
      _
    $region35: #{feedforward_nn.1} parent=1 // pred_check_branch
      %53 = sbr.rel (0) target = $region37
    $region36: #{feedforward_nn.1} parent=1 // pred_region
      %55 = dma.done [#allocation5], 256
    $region37: #{feedforward_nn.1} parent=1 // pred_fallthru
      _
    %v57 = vld [vmem:[#allocation2] sm:$0xff]
    %v58 = vpack.c.bf16 %v57, %v57
    %v59 = vld [vmem:[#allocation4] sm:$0xf]
    %v60 = vld [vmem:[#allocation4 + $0x4] sm:$0xf]
    %v61 = vld [vmem:[#allocation4 + $0x8] sm:$0xf]
    %v62 = vld [vmem:[#allocation4 + $0xc] sm:$0x7]
    %v63 = vld [vmem:[%s2] sm:$0x1]
    %v65 = vperm.slane %v63, 0
    %v71 = vunpack.c.l.b16 %v59
    %v72 = vunpack.c.l.b16 %v60
    %v73 = vunpack.c.l.b16 %v61
    %v74 = vunpack.c.l.b16 %v62
    %v75 = vpack.c.b16 %v72, %v71
    %v76 = vpack.c.b16 %v74, %v73
    %vm78 = vcmask 244736
    %v80 = vsel %vm78, %v58, 0
    %vm82 = vcmask 1046528
    %v84 = vsel %vm82, %v76, 0
    %86 = vmatpush.bf16.msra.mxu0 0
    %87 = vmatpush.bf16.msra.mxu0 0
    %88 = vmatpush.bf16.msra.mxu0 0
    %89 = vmatpush.bf16.msra.mxu0 0
    %90 = vmatpush.bf16.msra.mxu0 0
    %91 = vmatpush.bf16.msra.mxu0 0
    %92 = vmatpush.bf16.msra.mxu0 %v84
    %93 = vmatpush.bf16.msra.mxu0 %v75
    %94 = vmatmul.bf16.gmra.mxu0 %v80
    %v95 = vpop.f32.mrf.mxu0
    %v96 = vadd.f32 %v65, %v95
    %v97 = vpop.f32.mrf.mxu0
    %98 = vdwg.mxu0
    %v99 = vmax.f32 %v96, 0.0
    %v100 = vpack.c.bf16 %v99, %v99
    %v101 = vld [vmem:[%s3] sm:$0xf]
    %v102 = vld [vmem:[%s3 + $0x4] sm:$0xf]
    %v103 = vld [vmem:[%s3 + $0x8] sm:$0xf]
    %v104 = vld [vmem:[%s3 + $0xc] sm:$0xf]
    %v105 = vld [vmem:[%s3 + $0x10] sm:$0xf]
    %v106 = vld [vmem:[%s3 + $0x14] sm:$0xf]
    %v107 = vld [vmem:[%s3 + $0x18] sm:$0xf]
    %v108 = vld [vmem:[%s3 + $0x1c] sm:$0xf]
    %v109 = vld [vmem:[%s3 + $0x20] sm:$0xf]
    %v110 = vld [vmem:[%s3 + $0x24] sm:$0xf]
    %v111 = vld [vmem:[%s3 + $0x28] sm:$0xf]
    %v112 = vld [vmem:[%s3 + $0x2c] sm:$0xf]
    %v113 = vld [vmem:[%s3 + $0x30] sm:$0xf]
    %v114 = vld [vmem:[%s3 + $0x34] sm:$0xf]
    %v115 = vld [vmem:[%s3 + $0x38] sm:$0xf]
    %v116 = vld [vmem:[%s3 + $0x3c] sm:$0xf]
    %v117 = vld [vmem:[%s4] sm:$0x1]
    %v119 = vperm.slane %v117, 0
    %v137 = vunpack.c.l.b16 %v101
    %v138 = vunpack.c.l.b16 %v102
    %v139 = vunpack.c.l.b16 %v103
    %v140 = vunpack.c.l.b16 %v104
    %v141 = vunpack.c.l.b16 %v105
    %v142 = vunpack.c.l.b16 %v106
    %v143 = vunpack.c.l.b16 %v107
    %v144 = vunpack.c.l.b16 %v108
    %v145 = vunpack.c.l.b16 %v109
    %v146 = vunpack.c.l.b16 %v110
    %v147 = vunpack.c.l.b16 %v111
    %v148 = vunpack.c.l.b16 %v112
    %v149 = vunpack.c.l.b16 %v113
    %v150 = vunpack.c.l.b16 %v114
    %v151 = vunpack.c.l.b16 %v115
    %v152 = vunpack.c.l.b16 %v116
    %v153 = vpack.c.b16 %v138, %v137
    %v154 = vpack.c.b16 %v140, %v139
    %v155 = vpack.c.b16 %v142, %v141
    %v156 = vpack.c.b16 %v144, %v143
    %v157 = vpack.c.b16 %v146, %v145
    %v158 = vpack.c.b16 %v148, %v147
    %v159 = vpack.c.b16 %v150, %v149
    %v160 = vpack.c.b16 %v152, %v151
    %169 = vmatpush.bf16.msra.mxu0 %v160
    %170 = vmatpush.bf16.msra.mxu0 %v159
    %171 = vmatpush.bf16.msra.mxu0 %v158
    %172 = vmatpush.bf16.msra.mxu0 %v157
    %173 = vmatpush.bf16.msra.mxu0 %v156
    %174 = vmatpush.bf16.msra.mxu0 %v155
    %175 = vmatpush.bf16.msra.mxu0 %v154
    %176 = vmatpush.bf16.msra.mxu0 %v153
    %177 = vmatmul.bf16.gmra.mxu0 %v100
    %v178 = vpop.f32.mrf.mxu0
    %v179 = vadd.f32 %v119, %v178
    %v180 = vpop.f32.mrf.mxu0
    %181 = vdwg.mxu0
    %v182 = vmax.f32 %v179, 0.0
    %v183 = vpack.c.bf16 %v182, %v182
    %v184 = vld [vmem:[%s5] sm:$0xf]
    %v185 = vld [vmem:[%s5 + $0x4] sm:$0xf]
    %v186 = vld [vmem:[%s5 + $0x8] sm:$0xf]
    %v187 = vld [vmem:[%s5 + $0xc] sm:$0xf]
    %v188 = vld [vmem:[%s5 + $0x10] sm:$0xf]
    %v189 = vld [vmem:[%s5 + $0x14] sm:$0xf]
    %v190 = vld [vmem:[%s5 + $0x18] sm:$0xf]
    %v191 = vld [vmem:[%s5 + $0x1c] sm:$0xf]
    %v192 = vld [vmem:[%s5 + $0x20] sm:$0xf]
    %v193 = vld [vmem:[%s5 + $0x24] sm:$0xf]
    %v194 = vld [vmem:[%s5 + $0x28] sm:$0xf]
    %v195 = vld [vmem:[%s5 + $0x2c] sm:$0xf]
    %v196 = vld [vmem:[%s5 + $0x30] sm:$0xf]
    %v197 = vld [vmem:[%s5 + $0x34] sm:$0xf]
    %v198 = vld [vmem:[%s5 + $0x38] sm:$0xf]
    %v199 = vld [vmem:[%s5 + $0x3c] sm:$0xf]
    %v200 = vld [vmem:[%s6] sm:$0x1]
    %v202 = vperm.slane %v200, 0
    %v220 = vunpack.c.l.b16 %v184
    %v221 = vunpack.c.l.b16 %v185
    %v222 = vunpack.c.l.b16 %v186
    %v223 = vunpack.c.l.b16 %v187
    %v224 = vunpack.c.l.b16 %v188
    %v225 = vunpack.c.l.b16 %v189
    %v226 = vunpack.c.l.b16 %v190
    %v227 = vunpack.c.l.b16 %v191
    %v228 = vunpack.c.l.b16 %v192
    %v229 = vunpack.c.l.b16 %v193
    %v230 = vunpack.c.l.b16 %v194
    %v231 = vunpack.c.l.b16 %v195
    %v232 = vunpack.c.l.b16 %v196
    %v233 = vunpack.c.l.b16 %v197
    %v234 = vunpack.c.l.b16 %v198
    %v235 = vunpack.c.l.b16 %v199
    %v236 = vpack.c.b16 %v221, %v220
    %v237 = vpack.c.b16 %v223, %v222
    %v238 = vpack.c.b16 %v225, %v224
    %v239 = vpack.c.b16 %v227, %v226
    %v240 = vpack.c.b16 %v229, %v228
    %v241 = vpack.c.b16 %v231, %v230
    %v242 = vpack.c.b16 %v233, %v232
    %v243 = vpack.c.b16 %v235, %v234
    %252 = vmatpush.bf16.msra.mxu0 %v243
    %253 = vmatpush.bf16.msra.mxu0 %v242
    %254 = vmatpush.bf16.msra.mxu0 %v241
    %255 = vmatpush.bf16.msra.mxu0 %v240
    %256 = vmatpush.bf16.msra.mxu0 %v239
    %257 = vmatpush.bf16.msra.mxu0 %v238
    %258 = vmatpush.bf16.msra.mxu0 %v237
    %259 = vmatpush.bf16.msra.mxu0 %v236
    %260 = vmatmul.bf16.gmra.mxu0 %v183
    %v261 = vpop.f32.mrf.mxu0
    %v262 = vadd.f32 %v202, %v261
    %v263 = vpop.f32.mrf.mxu0
    %264 = vdwg.mxu0
    %vm265 = vcmask 15360
    %266 = vst.msk [vmem:[%s7] sm:$0xff] %vm265, %v262
    // Predicated region
    $region38: #{feedforward_nn.1} parent=1 // pred_check
      _
    $region39: #{feedforward_nn.1} parent=1 // pred_check_branch
      %268 = sbr.rel (0) target = $region41
    $region40: #{feedforward_nn.1} parent=1 // pred_region
      _
    $region41: #{feedforward_nn.1} parent=1 // pred_fallthru
      _
    // Predicated region
    $region42: #{feedforward_nn.1} parent=1 // pred_check
      _
    $region43: #{feedforward_nn.1} parent=1 // pred_check_branch
      %270 = sbr.rel (0) target = $region45
    $region44: #{feedforward_nn.1} parent=1 // pred_region
      _
    $region45: #{feedforward_nn.1} parent=1 // pred_fallthru
      _
    %271 = vsyncpa [#allocation3], 1
    %272 = vsyncpa [#allocation5], 1

</llo_original>
